<compile_context>
chip_gen: v6e
topology: v6e:2x2x1
jax: 0.10.0
libtpu: 0.0.40
codegen_flags: <defaults>
</compile_context>

<pallas_src>
import functools

import jax
import jax.numpy as jnp
from jax.experimental import pallas as pl
from jax.experimental.pallas import tpu as pltpu


def _negbin_kernel(h_ref, w_ref, b_ref, out_ref, *, out_size):
    # Single fused matmul: (TB, H) @ (H, 2*O) -> (TB, 2*O), f32 accumulation.
    z = jnp.dot(h_ref[...], w_ref[...],
                preferred_element_type=jnp.float32) + b_ref[...]

    # Numerically stable softplus: exactly one exp + one log1p per element.
    # For z > 20 the linear branch is used (exp clamped so it never overflows).
    e = jnp.exp(jnp.minimum(z, 20.0))
    sp = jnp.where(z > 20.0, z, jnp.log1p(e))

    # alpha head (second half of the lanes) gets the +1e-6 epsilon in-kernel.
    col = jax.lax.broadcasted_iota(jnp.int32, sp.shape, 1)
    eps = jnp.where(col >= out_size, jnp.float32(1e-6), jnp.float32(0.0))
    out_ref[...] = (sp + eps).astype(out_ref.dtype)


def prepare_negbin_params(w_mu, b_mu, w_sigma, b_sigma):
    """Fuse the two PyTorch-layout heads once (call at parameter-init time).

    w_*: (O, H) PyTorch Linear layout; b_*: (O,).
    Returns (w_fused (H, 2*O), b_fused (1, 2*O)).
    """
    w_fused = jnp.concatenate([w_mu, w_sigma], axis=0).T      # (H, 2*O)
    b_fused = jnp.concatenate([b_mu, b_sigma], axis=0)[None]  # (1, 2*O)
    return w_fused, b_fused


def negative_binomial_forward(h, w_fused, b_fused, output_size, *,
                              block_b=256):
    """h: (B, H) float32; w_fused: (H, 2*O); b_fused: (1, 2*O).

    Returns (mu_t, alpha_t), each (B, O) float32.
    """
    B, H = h.shape
    two_o = w_fused.shape[1]
    assert two_o == 2 * output_size

    # Tile the batch dimension; keep the (8, 128) sublane rule satisfied
    # (block rows multiple of 8, or equal to the full dim for tiny B).
    if B >= 8:
        tb = min(B, block_b)
        tb = max(8, (tb // 8) * 8)
    else:
        tb = B
    grid = (pl.cdiv(B, tb),)

    kernel = functools.partial(_negbin_kernel, out_size=output_size)

    out = pl.pallas_call(
        kernel,
        out_shape=jax.ShapeDtypeStruct((B, two_o), jnp.float32),
        grid=grid,
        in_specs=[
            pl.BlockSpec((tb, H), lambda i: (i, 0)),       # streamed h tiles
            pl.BlockSpec((H, two_o), lambda i: (0, 0)),    # resident weights
            pl.BlockSpec((1, two_o), lambda i: (0, 0)),    # resident bias
        ],
        out_specs=pl.BlockSpec((tb, two_o), lambda i: (i, 0)),
        compiler_params=pltpu.CompilerParams(
            dimension_semantics=("parallel",)),
    )(h, w_fused, b_fused)

    # Split the lane-dense slab outside the kernel.
    mu_t = out[:, :output_size]
    alpha_t = out[:, output_size:]
    return mu_t, alpha_t


if __name__ == "__main__":
    # Small shapes consistent with the module: hidden=32, embedding(output)=16
    batch, input_size, output_size = 8, 32, 16

    key = jax.random.PRNGKey(0)
    k_h, k_wm, k_bm, k_ws, k_bs = jax.random.split(key, 5)

    h = jax.random.normal(k_h, (batch, input_size), dtype=jnp.float32)

    # Deterministic parameter init (synthetic, PyTorch Linear shapes: (out, in)).
    w_mu = jax.random.normal(k_wm, (output_size, input_size), jnp.float32) * 0.1
    b_mu = jax.random.normal(k_bm, (output_size,), jnp.float32) * 0.1
    w_sigma = jax.random.normal(k_ws, (output_size, input_size), jnp.float32) * 0.1
    b_sigma = jax.random.normal(k_bs, (output_size,), jnp.float32) * 0.1

    # One-time parameter fusion (would live at module-init time in practice).
    w_fused, b_fused = prepare_negbin_params(w_mu, b_mu, w_sigma, b_sigma)

    mu_t, alpha_t = negative_binomial_forward(h, w_fused, b_fused, output_size)
    jax.block_until_ready((mu_t, alpha_t))

    # Reference check in plain JAX (matches the original module's math).
    ref_mu = jnp.log(1.0 + jnp.exp(h @ w_mu.T + b_mu))
    ref_alpha = jnp.log(1.0 + jnp.exp(h @ w_sigma.T + b_sigma)) + 1e-6
    assert jnp.allclose(mu_t, ref_mu, atol=1e-5), "mu mismatch"
    assert jnp.allclose(alpha_t, ref_alpha, atol=1e-5), "alpha mismatch"

    print("KERNEL_OK")
</pallas_src>

<mosaic_0001>
module attributes {stable_mosaic.version = 11 : i64} {
  func.func @_negbin_kernel(%arg0: i32, %arg1: memref<8x32xf32, #tpu.memory_space<vmem>>, %arg2: memref<32x32xf32, #tpu.memory_space<vmem>>, %arg3: memref<1x32xf32, #tpu.memory_space<vmem>>, %arg4: memref<8x32xf32, #tpu.memory_space<vmem>>) attributes {dimension_semantics = [#tpu.dimension_semantics<parallel>], iteration_bounds = array<i64: 1>, scalar_prefetch = 0 : i64, scratch_operands = 0 : i64, tpu.core_type = #tpu.core_type<tc>, window_params = [{transform_indices = @transform_0, window_bounds = array<i64: 8, 32>}, {pipeline_mode = #tpu.pipeline_mode<synchronous>, transform_indices = @transform_1, window_bounds = array<i64: 32, 32>}, {pipeline_mode = #tpu.pipeline_mode<synchronous>, transform_indices = @transform_2, window_bounds = array<i64: 1, 32>}, {transform_indices = @transform_3, window_bounds = array<i64: 8, 32>}]} {
    %c0 = arith.constant 0 : index
    %c0_0 = arith.constant 0 : index
    %0 = vector.load %arg1[%c0, %c0_0] : memref<8x32xf32, #tpu.memory_space<vmem>>, vector<8x32xf32>
    %c0_1 = arith.constant 0 : index
    %c0_2 = arith.constant 0 : index
    %1 = vector.load %arg2[%c0_1, %c0_2] : memref<32x32xf32, #tpu.memory_space<vmem>>, vector<32x32xf32>
    %cst = arith.constant dense<0.000000e+00> : vector<8x32xf32>
    %2 = tpu.matmul %0, %1, %cst {dimension_numbers = #tpu.dot_dimension_numbers<[1], [0], [0], [1], [0, 0, 1, 1], [], []>} : vector<8x32xf32>, vector<32x32xf32>, vector<8x32xf32> -> vector<8x32xf32>
    %c0_3 = arith.constant 0 : index
    %c0_4 = arith.constant 0 : index
    %3 = vector.load %arg3[%c0_3, %c0_4] : memref<1x32xf32, #tpu.memory_space<vmem>>, vector<1x32xf32>
    %4 = vector.broadcast %3 : vector<1x32xf32> to vector<8x32xf32>
    %5 = arith.addf %2, %4 : vector<8x32xf32>
    %cst_5 = arith.constant 2.000000e+01 : f32
    %6 = vector.broadcast %cst_5 : f32 to vector<8x32xf32>
    %7 = arith.minimumf %5, %6 : vector<8x32xf32>
    %8 = math.exp %7 : vector<8x32xf32>
    %cst_6 = arith.constant 2.000000e+01 : f32
    %9 = vector.broadcast %cst_6 : f32 to vector<8x32xf32>
    %10 = arith.cmpf ogt, %5, %9 : vector<8x32xf32>
    %11 = math.log1p %8 : vector<8x32xf32>
    %12 = arith.select %10, %5, %11 : vector<8x32xi1>, vector<8x32xf32>
    %13 = tpu.iota {dimensions = array<i32: 1>} : vector<8x32xi32>
    %c16_i32 = arith.constant 16 : i32
    %14 = vector.broadcast %c16_i32 : i32 to vector<8x32xi32>
    %15 = arith.cmpi sge, %13, %14 : vector<8x32xi32>
    %cst_7 = arith.constant 9.99999997E-7 : f32
    %cst_8 = arith.constant 0.000000e+00 : f32
    %16 = vector.broadcast %cst_7 : f32 to vector<8x32xf32>
    %17 = vector.broadcast %cst_8 : f32 to vector<8x32xf32>
    %18 = arith.select %15, %16, %17 : vector<8x32xi1>, vector<8x32xf32>
    %19 = arith.addf %12, %18 : vector<8x32xf32>
    %c0_9 = arith.constant 0 : index
    %c0_10 = arith.constant 0 : index
    %20 = vector.load %arg4[%c0_9, %c0_10] : memref<8x32xf32, #tpu.memory_space<vmem>>, vector<8x32xf32>
    tpu.vector_store %arg4[%c0_9, %c0_10], %19 {strides = array<i32>} : memref<8x32xf32, #tpu.memory_space<vmem>>, vector<8x32xf32>,
    return
  }
  func.func @transform_0(%arg0: i32) -> (i32, i32) {
    %c0_i32 = arith.constant 0 : i32
    %c0_i32_0 = arith.constant 0 : i32
    return %arg0, %c0_i32 : i32, i32
  }
  func.func @transform_1(%arg0: i32) -> (i32, i32) {
    %c0_i32 = arith.constant 0 : i32
    %c0_i32_0 = arith.constant 0 : i32
    %c0_i32_1 = arith.constant 0 : i32
    return %c0_i32, %c0_i32_0 : i32, i32
  }
  func.func @transform_2(%arg0: i32) -> (i32, i32) {
    %c0_i32 = arith.constant 0 : i32
    %c0_i32_0 = arith.constant 0 : i32
    %c0_i32_1 = arith.constant 0 : i32
    return %c0_i32, %c0_i32_0 : i32, i32
  }
  func.func @transform_3(%arg0: i32) -> (i32, i32) {
    %c0_i32 = arith.constant 0 : i32
    %c0_i32_0 = arith.constant 0 : i32
    return %arg0, %c0_i32 : i32, i32
  }
}

</mosaic_0001>

<llo_original>
// kernel: tpu_custom_call.1
$region0: #{tpu_custom_call.1}
  #allocation0 [shape = 'u32[]', space=smem, size = 0x4, offset = 0x4, fixed_abs, tag = 'smem constant byte address 0x4 - core index']
  #allocation1 [shape = 'u32[144,128]{1,0:T(1,128)}', space=vmem, size = 0x12000, scoped, tag = 'internal scratch']
  %s0 = inlined_call_operand.hbm [shape: f32[8,32], index: 0, kind: input, shape index: {}]
  %s1 = inlined_call_operand.hbm [shape: f32[32,32], index: 1, kind: input, shape index: {}]
  %s2 = inlined_call_operand.vmem [shape: f32[1,32], index: 2, kind: input, shape index: {}]
  %s3 = inlined_call_operand.hbm [shape: f32[8,32], index: 3, kind: output, shape index: {}]
  %s4 = sld [smem:[#allocation0]]
  $region30: #{tpu_custom_call.1} parent=0
    _
  %s6 = ssub.s32 1, %s4
  %s7 = scalar_select 0, %s6, %s4
  $region1: #{tpu_custom_call.1} parent=0
    #allocation2 [shape = 'u8[4096]{0}', space=vmem, size = 0x1000, scoped, tag = 'input window, operand 0, single buffered']
    #allocation3 [shape = 's32[1]{0}', space=sflag, size = 0x4, scoped, tag = 'scoped memory for tpu_custom_call.1']
    #allocation4 [shape = 's32[1]{0}', space=sflag, size = 0x4, scoped, tag = 'scoped memory for tpu_custom_call.1']
    #allocation5 [shape = 'u8[16384]{0}', space=vmem, size = 0x4000, scoped, tag = 'input window, operand 1, single buffered']
    #allocation6 [shape = 's32[1]{0}', space=sflag, size = 0x4, scoped, tag = 'scoped memory for tpu_custom_call.1']
    #allocation7 [shape = 'u8[4096]{0}', space=vmem, size = 0x1000, scoped, tag = 'output window, operand 0, single buffered']
    %8 = vsyncpa [#allocation3], 0
    %9 = vsyncpa [#allocation6], 0
    %10 = vsyncpa [#allocation4], 0
    // Predicated region
    $region2: #{tpu_custom_call.1} parent=1 // pred_check
      _
    $region3: #{tpu_custom_call.1} parent=1 // pred_check_branch
      %12 = sbr.rel (0) target = $region5
    $region4: #{tpu_custom_call.1} parent=1 // pred_region
      %s14 = ssub.s32 128, 128
      %15 = vsyncadd [#allocation3], %s14
      %s17 = sshll.u32 [#allocation2], 4
      %s18 = int_to_ptr.vmem [resolvable:$true] %s17
      %20 = dma.hbm_to_vmem [thread:$0]  %s0, 128, %s18, [#allocation3]
    $region5: #{tpu_custom_call.1} parent=1 // pred_fallthru
      _
    // Predicated region
    $region6: #{tpu_custom_call.1} parent=1 // pred_check
      _
    $region7: #{tpu_custom_call.1} parent=1 // pred_check_branch
      %22 = sbr.rel (0) target = $region9
    $region8: #{tpu_custom_call.1} parent=1 // pred_region
      %s24 = ssub.s32 512, 512
      %25 = vsyncadd [#allocation6], %s24
      %s26 = sshll.u32 [#allocation5], 4
      %s27 = int_to_ptr.vmem [resolvable:$true] %s26
      %32 = dma.hbm_to_vmem [thread:$0]  %s1, 512, %s27, [#allocation6], 128, 128, 8
    $region9: #{tpu_custom_call.1} parent=1 // pred_fallthru
      _
    // Predicated region
    $region10: #{tpu_custom_call.1} parent=1 // pred_check
      _
    $region11: #{tpu_custom_call.1} parent=1 // pred_check_branch
      %34 = sbr.rel (0) target = $region13
    $region12: #{tpu_custom_call.1} parent=1 // pred_region
      _
    $region13: #{tpu_custom_call.1} parent=1 // pred_fallthru
      _
    // Predicated region
    $region14: #{tpu_custom_call.1} parent=1 // pred_check
      _
    $region15: #{tpu_custom_call.1} parent=1 // pred_check_branch
      %36 = sbr.rel (0) target = $region17
    $region16: #{tpu_custom_call.1} parent=1 // pred_region
      %37 = dma.done [#allocation3], 128
    $region17: #{tpu_custom_call.1} parent=1 // pred_fallthru
      _
    // Predicated region
    $region18: #{tpu_custom_call.1} parent=1 // pred_check
      _
    $region19: #{tpu_custom_call.1} parent=1 // pred_check_branch
      %39 = sbr.rel (0) target = $region21
    $region20: #{tpu_custom_call.1} parent=1 // pred_region
      %40 = dma.done [#allocation6], 512
    $region21: #{tpu_custom_call.1} parent=1 // pred_fallthru
      _
    %v41 = vld [vmem:[#allocation2] sm:$0xff]
    %v42 = vld [vmem:[#allocation5] sm:$0xff]
    %v43 = vld [vmem:[#allocation5 + $0x8] sm:$0xff]
    %v44 = vld [vmem:[#allocation5 + $0x10] sm:$0xff]
    %v45 = vld [vmem:[#allocation5 + $0x18] sm:$0xff]
    %v46 = vld [vmem:[%s2] sm:$0x1]
    %v48 = vlaneseq
    %v49 = vshrl.u32 %v48, 7
    %v50 = vsub.s32 0, %v49
    %v51 = vrot.slane %v46, %v50
    %vm53 = vcmask 261120
    %v55 = vsel %vm53, %v41, 0
    %57 = vmatprep.subr.mxu0 0.0
    %58 = vmatpush1.msra.mxu0 0.0
    %59 = vmatprep.subr.mxu0 0.0
    %60 = vmatpush1.msra.mxu0 0.0
    %61 = vmatprep.subr.mxu0 0.0
    %62 = vmatpush1.msra.mxu0 0.0
    %63 = vmatprep.subr.mxu0 0.0
    %64 = vmatpush1.msra.mxu0 0.0
    %65 = vmatprep.subr.mxu0 0.0
    %66 = vmatpush1.msra.mxu0 0.0
    %67 = vmatprep.subr.mxu0 0.0
    %68 = vmatpush1.msra.mxu0 0.0
    %69 = vmatprep.subr.mxu0 0.0
    %70 = vmatpush1.msra.mxu0 0.0
    %71 = vmatprep.subr.mxu0 0.0
    %72 = vmatpush1.msra.mxu0 0.0
    %73 = vmatprep.subr.mxu0 0.0
    %74 = vmatpush1.msra.mxu0 0.0
    %75 = vmatprep.subr.mxu0 0.0
    %76 = vmatpush1.msra.mxu0 0.0
    %77 = vmatprep.subr.mxu0 0.0
    %78 = vmatpush1.msra.mxu0 0.0
    %79 = vmatprep.subr.mxu0 0.0
    %80 = vmatpush1.msra.mxu0 0.0
    %81 = vmatprep.subr.mxu0 0.0
    %82 = vmatpush1.msra.mxu0 %v45
    %83 = vmatprep.subr.mxu0 0.0
    %84 = vmatpush1.msra.mxu0 %v44
    %85 = vmatprep.subr.mxu0 0.0
    %86 = vmatpush1.msra.mxu0 %v43
    %87 = vmatprep.subr.mxu0 0.0
    %88 = vmatpush1.msra.mxu0 %v42
    %89 = vmatprep.subr.mxu0 0.0
    %90 = vmatpush2.msra.mxu0 0.0
    %91 = vmatprep.subr.mxu0 0.0
    %92 = vmatpush2.msra.mxu0 0.0
    %93 = vmatprep.subr.mxu0 0.0
    %94 = vmatpush2.msra.mxu0 0.0
    %95 = vmatprep.subr.mxu0 0.0
    %96 = vmatpush2.msra.mxu0 0.0
    %97 = vmatprep.subr.mxu0 0.0
    %98 = vmatpush2.msra.mxu0 0.0
    %99 = vmatprep.subr.mxu0 0.0
    %100 = vmatpush2.msra.mxu0 0.0
    %101 = vmatprep.subr.mxu0 0.0
    %102 = vmatpush2.msra.mxu0 0.0
    %103 = vmatprep.subr.mxu0 0.0
    %104 = vmatpush2.msra.mxu0 0.0
    %105 = vmatprep.subr.mxu0 0.0
    %106 = vmatpush2.msra.mxu0 0.0
    %107 = vmatprep.subr.mxu0 0.0
    %108 = vmatpush2.msra.mxu0 0.0
    %109 = vmatprep.subr.mxu0 0.0
    %110 = vmatpush2.msra.mxu0 0.0
    %111 = vmatprep.subr.mxu0 0.0
    %112 = vmatpush2.msra.mxu0 0.0
    %113 = vmatprep.subr.mxu0 0.0
    %114 = vmatpush2.msra.mxu0 0.0
    %115 = vmatprep.subr.mxu0 0.0
    %116 = vmatpush2.msra.mxu0 0.0
    %117 = vmatprep.subr.mxu0 0.0
    %118 = vmatpush2.msra.mxu0 0.0
    %119 = vmatprep.subr.mxu0 0.0
    %120 = vmatpush2.msra.mxu0 0.0
    %121 = vmatprep.mubr.f32.mxu0 0.0
    %122 = vmatmul.mubr.f32.gmra.mxu0 %v55
    %v123 = vpop.f32.mrf.mxu0
    %v124 = vadd.f32 %v51, %v123
    %v125 = vpop.f32.mrf.mxu0
    %126 = vdwg.mxu0
    %v127 = vmin.f32 %v124, 20.0
    %v128 = vmul.f32 %v127, 1.442695
    %v129 = vpow.pop %v128
    %vm130 = vcmp.gt.f32.partialorder %v124, 20.0
    %v131 = vadd.f32 %v129, 1.0
    %v132 = vlog2.pop %v131
    %v133 = vmul.f32 %v132, 0.6931472
    %v134 = vmul.f32 -0.5, %v129
    %v135 = vadd.f32 %v134, 1.0
    %v136 = vmul.f32 %v135, %v129
    %v137 = vand.u32 2147483647, %v129
    %vm138 = vcmp.lt.f32.partialorder %v137, 0.0004427343
    %v139 = vsel %vm138, %v136, %v133
    %v140 = vsel %vm130, %v124, %v139
    %v141 = vlaneseq
    %v142 = vand.u32 %v141, 127
    %vm143 = vcmp.ge.s32.totalorder %v142, 16
    %v144 = vsel %vm143, 1e-06, 0.0
    %v145 = vadd.f32 %v140, %v144
    %146 = vst.msk [vmem:[#allocation7] sm:$0xff] %vm53, %v145
    // Predicated region
    $region22: #{tpu_custom_call.1} parent=1 // pred_check
      _
    $region23: #{tpu_custom_call.1} parent=1 // pred_check_branch
      %148 = sbr.rel (0) target = $region25
    $region24: #{tpu_custom_call.1} parent=1 // pred_region
      %s150 = ssub.s32 128, 128
      %151 = vsyncadd [#allocation4], %s150
      %s153 = sshll.u32 [#allocation7], 4
      %s154 = int_to_ptr.vmem [resolvable:$true] %s153
      %156 = dma.vmem_to_hbm [thread:$0]  %s154, 128, %s3, [#allocation4]
    $region25: #{tpu_custom_call.1} parent=1 // pred_fallthru
      _
    // Predicated region
    $region26: #{tpu_custom_call.1} parent=1 // pred_check
      _
    $region27: #{tpu_custom_call.1} parent=1 // pred_check_branch
      %158 = sbr.rel (0) target = $region29
    $region28: #{tpu_custom_call.1} parent=1 // pred_region
      %159 = dma.done [#allocation4], 128
    $region29: #{tpu_custom_call.1} parent=1 // pred_fallthru
      _
    %160 = vsyncpa [#allocation3], 1
    %161 = vsyncpa [#allocation6], 1
    %162 = vsyncpa [#allocation4], 1

</llo_original>
